<compile_context>
chip_gen: v7x
topology: tpu7x:2x2x1
jax: 0.10.0
libtpu: 0.0.40
codegen_flags: <defaults>
</compile_context>

<pallas_src>
import jax
import jax.numpy as jnp
from jax.experimental import pallas as pl
from jax.experimental.pallas import tpu as pltpu

LANES = 128  # TPU vreg lane width; all feature dims are padded to this.


def _round_up(x, m):
    return ((x + m - 1) // m) * m


def _pad_to(arr, shape):
    pads = [(0, s - d) for d, s in zip(arr.shape, shape)]
    return jnp.pad(arr, pads)


def _shared_mlp_kernel(x_ref,
                       w1_ref, b1_ref,
                       w2_ref, b2_ref,
                       w3_ref, b3_ref,
                       w4_ref, b4_ref,
                       o_ref):
    """Fused 4-layer MLP with sigmoid activations, all operands in VMEM."""

    def sigmoid(z):
        # exp -> EUP, approximate reciprocal -> EUP: both live in the EUP VLIW
        # slot and overlap with MXU / VPU work.
        return pl.reciprocal(1.0 + jnp.exp(-z), approx=True)

    def dense_sigmoid(h, w_ref, b_ref):
        # bf16 MXU operands, f32 accumulation, f32 bias + activation.
        z = jnp.dot(h.astype(jnp.bfloat16), w_ref[...],
                    preferred_element_type=jnp.float32) + b_ref[...]
        return sigmoid(z)

    h = x_ref[...].astype(jnp.float32)
    h = dense_sigmoid(h, w1_ref, b1_ref)   # n_start -> 64   (padded 128 -> 128)
    h = dense_sigmoid(h, w2_ref, b2_ref)   # 64      -> 32   (padded 128 -> 128)
    h = dense_sigmoid(h, w3_ref, b3_ref)   # 32      -> 64   (padded 128 -> 128)
    h = dense_sigmoid(h, w4_ref, b4_ref)   # 64      -> n_out(padded 128 -> 128)
    o_ref[...] = h.astype(o_ref.dtype)


def init_shared_params(key, n_start, n_out, dtype=jnp.float32):
    """Torch-like nn.Linear init: U(-1/sqrt(fan_in), 1/sqrt(fan_in)).
    Weights stored as [in, out] (pre-transposed vs torch's [out, in])."""
    dims = [(n_start, 64), (64, 32), (32, 64), (64, n_out)]
    params = {}
    for idx, (fan_in, fan_out) in enumerate(dims, start=1):
        key, kw, kb = jax.random.split(key, 3)
        bound = 1.0 / jnp.sqrt(jnp.asarray(fan_in, dtype))
        params[f"w{idx}"] = jax.random.uniform(
            kw, (fan_in, fan_out), dtype, minval=-bound, maxval=bound)
        params[f"b{idx}"] = jax.random.uniform(
            kb, (1, fan_out), dtype, minval=-bound, maxval=bound)
    return params


def pack_params(params):
    """Zero-pad all weights to [128,128] bf16 and biases to [1,128] f32.

    Zero-padded weight ROWS are required for correctness: padded activation
    lanes hold sigmoid(0)=0.5 and must contribute nothing to the next layer.
    """
    packed = {}
    for idx in range(1, 5):
        w = params[f"w{idx}"]
        b = params[f"b{idx}"]
        packed[f"w{idx}"] = _pad_to(w, (LANES, LANES)).astype(jnp.bfloat16)
        packed[f"b{idx}"] = _pad_to(b, (1, LANES)).astype(jnp.float32)
    return packed


def shared_mlp(x, packed, n_out, *, batch_tile=512):
    """Run the fused Shared-MLP Pallas kernel.

    x      : [B, n_start] float32 (n_start <= 128)
    packed : dict from pack_params (padded bf16 weights, padded f32 biases)
    n_out  : true (unpadded) output feature count
    """
    B, n_in = x.shape
    assert n_in <= LANES and n_out <= LANES

    # 8-aligned batch tile; pad the batch so the grid divides evenly.
    tb = _round_up(min(batch_tile, _round_up(B, 8)), 8)
    B_pad = _round_up(B, tb)
    x_p = jnp.pad(x, ((0, B_pad - B), (0, LANES - n_in)))

    grid = (B_pad // tb,)

    def wspec():
        return pl.BlockSpec((LANES, LANES), lambda i: (0, 0))

    def bspec():
        return pl.BlockSpec((1, LANES), lambda i: (0, 0))

    # Advisory cost for XLA's scheduler (per whole call, padded dims).
    flops = 2 * B_pad * LANES * LANES * 4
    transcendentals = 2 * B_pad * LANES * 4          # exp + rcp per element/layer
    bytes_accessed = (B_pad * LANES * 4 * 2          # f32 activations in + out
                      + 4 * LANES * LANES * 2        # bf16 weights
                      + 4 * LANES * 4)               # f32 biases

    out = pl.pallas_call(
        _shared_mlp_kernel,
        out_shape=jax.ShapeDtypeStruct((B_pad, LANES), x.dtype),
        grid_spec=pltpu.PrefetchScalarGridSpec(
            num_scalar_prefetch=0,
            grid=grid,
            in_specs=[
                pl.BlockSpec((tb, LANES), lambda i: (i, 0)),
                wspec(), bspec(),
                wspec(), bspec(),
                wspec(), bspec(),
                wspec(), bspec(),
            ],
            out_specs=pl.BlockSpec((tb, LANES), lambda i: (i, 0)),
        ),
        compiler_params=pltpu.CompilerParams(
            dimension_semantics=("parallel",),
        ),
        cost_estimate=pl.CostEstimate(
            flops=flops,
            transcendentals=transcendentals,
            bytes_accessed=bytes_accessed,
        ),
    )(x_p,
      packed["w1"], packed["b1"],
      packed["w2"], packed["b2"],
      packed["w3"], packed["b3"],
      packed["w4"], packed["b4"])

    # Drop batch padding and padded output lanes.
    return out[:B, :n_out]


def shared_mlp_ref(x, params):
    """Pure-JAX f32 reference of the same forward pass (unpadded params)."""
    h = x
    for idx in range(1, 5):
        h = jax.nn.sigmoid(h @ params[f"w{idx}"] + params[f"b{idx}"])
    return h


if __name__ == "__main__":
    key = jax.random.PRNGKey(0)
    k_params, k_x = jax.random.split(key)

    n_start, n_out = 32, 16
    batch = 64

    params = init_shared_params(k_params, n_start, n_out)
    packed = pack_params(params)
    x = jax.random.normal(k_x, (batch, n_start), jnp.float32)

    # batch_tile=16 -> 4 grid steps even at this small demo size, exercising
    # the pipelined / multi-step "parallel" grid path.
    out = shared_mlp(x, packed, n_out, batch_tile=16)
    out = jax.block_until_ready(out)

    ref = shared_mlp_ref(x, params)
    assert out.shape == (batch, n_out)
    max_err = float(jnp.max(jnp.abs(out - ref)))
    # bf16 matmul operands + approx EUP reciprocal vs f32 reference.
    assert max_err < 2e-2, f"Pallas kernel mismatch vs reference (max abs err {max_err})"

    print("KERNEL_OK")
</pallas_src>

<mosaic_0001>
module attributes {stable_mosaic.version = 11 : i64} {
  func.func @_shared_mlp_kernel(%arg0: i32, %arg1: memref<16x128xf32, #tpu.memory_space<vmem>>, %arg2: memref<128x128xbf16, #tpu.memory_space<vmem>>, %arg3: memref<1x128xf32, #tpu.memory_space<vmem>>, %arg4: memref<128x128xbf16, #tpu.memory_space<vmem>>, %arg5: memref<1x128xf32, #tpu.memory_space<vmem>>, %arg6: memref<128x128xbf16, #tpu.memory_space<vmem>>, %arg7: memref<1x128xf32, #tpu.memory_space<vmem>>, %arg8: memref<128x128xbf16, #tpu.memory_space<vmem>>, %arg9: memref<1x128xf32, #tpu.memory_space<vmem>>, %arg10: memref<16x128xf32, #tpu.memory_space<vmem>>) attributes {dimension_semantics = [#tpu.dimension_semantics<parallel>], iteration_bounds = array<i64: 4>, scalar_prefetch = 0 : i64, scratch_operands = 0 : i64, tpu.core_type = #tpu.core_type<tc>, window_params = [{transform_indices = @transform_0, window_bounds = array<i64: 16, 128>}, {pipeline_mode = #tpu.pipeline_mode<synchronous>, transform_indices = @transform_1, window_bounds = array<i64: 128, 128>}, {pipeline_mode = #tpu.pipeline_mode<synchronous>, transform_indices = @transform_2, window_bounds = array<i64: 1, 128>}, {pipeline_mode = #tpu.pipeline_mode<synchronous>, transform_indices = @transform_3, window_bounds = array<i64: 128, 128>}, {pipeline_mode = #tpu.pipeline_mode<synchronous>, transform_indices = @transform_4, window_bounds = array<i64: 1, 128>}, {pipeline_mode = #tpu.pipeline_mode<synchronous>, transform_indices = @transform_5, window_bounds = array<i64: 128, 128>}, {pipeline_mode = #tpu.pipeline_mode<synchronous>, transform_indices = @transform_6, window_bounds = array<i64: 1, 128>}, {pipeline_mode = #tpu.pipeline_mode<synchronous>, transform_indices = @transform_7, window_bounds = array<i64: 128, 128>}, {pipeline_mode = #tpu.pipeline_mode<synchronous>, transform_indices = @transform_8, window_bounds = array<i64: 1, 128>}, {transform_indices = @transform_9, window_bounds = array<i64: 16, 128>}]} {
    %c0 = arith.constant 0 : index
    %c0_0 = arith.constant 0 : index
    %0 = vector.load %arg1[%c0, %c0_0] : memref<16x128xf32, #tpu.memory_space<vmem>>, vector<16x128xf32>
    %1 = arith.truncf %0 : vector<16x128xf32> to vector<16x128xbf16>
    %c0_1 = arith.constant 0 : index
    %c0_2 = arith.constant 0 : index
    %2 = vector.load %arg2[%c0_1, %c0_2] : memref<128x128xbf16, #tpu.memory_space<vmem>>, vector<128x128xbf16>
    %cst = arith.constant dense<0.000000e+00> : vector<16x128xf32>
    %3 = tpu.matmul %1, %2, %cst {dimension_numbers = #tpu.dot_dimension_numbers<[1], [0], [0], [1], [0, 0, 1, 1], [], []>} : vector<16x128xbf16>, vector<128x128xbf16>, vector<16x128xf32> -> vector<16x128xf32>
    %c0_3 = arith.constant 0 : index
    %c0_4 = arith.constant 0 : index
    %4 = vector.load %arg3[%c0_3, %c0_4] : memref<1x128xf32, #tpu.memory_space<vmem>>, vector<1x128xf32>
    %5 = vector.broadcast %4 : vector<1x128xf32> to vector<16x128xf32>
    %6 = arith.addf %3, %5 : vector<16x128xf32>
    %cst_5 = arith.constant 0.000000e+00 : f32
    %7 = vector.broadcast %cst_5 : f32 to vector<16x128xf32>
    %8 = arith.subf %7, %6 : vector<16x128xf32>
    %9 = math.exp %8 : vector<16x128xf32>
    %cst_6 = arith.constant 1.000000e+00 : f32
    %10 = vector.broadcast %cst_6 : f32 to vector<16x128xf32>
    %11 = arith.addf %10, %9 : vector<16x128xf32>
    %12 = tpu.reciprocal %11 {approx = true} : vector<16x128xf32> -> vector<16x128xf32>
    %13 = arith.truncf %12 : vector<16x128xf32> to vector<16x128xbf16>
    %c0_7 = arith.constant 0 : index
    %c0_8 = arith.constant 0 : index
    %14 = vector.load %arg4[%c0_7, %c0_8] : memref<128x128xbf16, #tpu.memory_space<vmem>>, vector<128x128xbf16>
    %cst_9 = arith.constant dense<0.000000e+00> : vector<16x128xf32>
    %15 = tpu.matmul %13, %14, %cst_9 {dimension_numbers = #tpu.dot_dimension_numbers<[1], [0], [0], [1], [0, 0, 1, 1], [], []>} : vector<16x128xbf16>, vector<128x128xbf16>, vector<16x128xf32> -> vector<16x128xf32>
    %c0_10 = arith.constant 0 : index
    %c0_11 = arith.constant 0 : index
    %16 = vector.load %arg5[%c0_10, %c0_11] : memref<1x128xf32, #tpu.memory_space<vmem>>, vector<1x128xf32>
    %17 = vector.broadcast %16 : vector<1x128xf32> to vector<16x128xf32>
    %18 = arith.addf %15, %17 : vector<16x128xf32>
    %cst_12 = arith.constant 0.000000e+00 : f32
    %19 = vector.broadcast %cst_12 : f32 to vector<16x128xf32>
    %20 = arith.subf %19, %18 : vector<16x128xf32>
    %21 = math.exp %20 : vector<16x128xf32>
    %cst_13 = arith.constant 1.000000e+00 : f32
    %22 = vector.broadcast %cst_13 : f32 to vector<16x128xf32>
    %23 = arith.addf %22, %21 : vector<16x128xf32>
    %24 = tpu.reciprocal %23 {approx = true} : vector<16x128xf32> -> vector<16x128xf32>
    %25 = arith.truncf %24 : vector<16x128xf32> to vector<16x128xbf16>
    %c0_14 = arith.constant 0 : index
    %c0_15 = arith.constant 0 : index
    %26 = vector.load %arg6[%c0_14, %c0_15] : memref<128x128xbf16, #tpu.memory_space<vmem>>, vector<128x128xbf16>
    %cst_16 = arith.constant dense<0.000000e+00> : vector<16x128xf32>
    %27 = tpu.matmul %25, %26, %cst_16 {dimension_numbers = #tpu.dot_dimension_numbers<[1], [0], [0], [1], [0, 0, 1, 1], [], []>} : vector<16x128xbf16>, vector<128x128xbf16>, vector<16x128xf32> -> vector<16x128xf32>
    %c0_17 = arith.constant 0 : index
    %c0_18 = arith.constant 0 : index
    %28 = vector.load %arg7[%c0_17, %c0_18] : memref<1x128xf32, #tpu.memory_space<vmem>>, vector<1x128xf32>
    %29 = vector.broadcast %28 : vector<1x128xf32> to vector<16x128xf32>
    %30 = arith.addf %27, %29 : vector<16x128xf32>
    %cst_19 = arith.constant 0.000000e+00 : f32
    %31 = vector.broadcast %cst_19 : f32 to vector<16x128xf32>
    %32 = arith.subf %31, %30 : vector<16x128xf32>
    %33 = math.exp %32 : vector<16x128xf32>
    %cst_20 = arith.constant 1.000000e+00 : f32
    %34 = vector.broadcast %cst_20 : f32 to vector<16x128xf32>
    %35 = arith.addf %34, %33 : vector<16x128xf32>
    %36 = tpu.reciprocal %35 {approx = true} : vector<16x128xf32> -> vector<16x128xf32>
    %37 = arith.truncf %36 : vector<16x128xf32> to vector<16x128xbf16>
    %c0_21 = arith.constant 0 : index
    %c0_22 = arith.constant 0 : index
    %38 = vector.load %arg8[%c0_21, %c0_22] : memref<128x128xbf16, #tpu.memory_space<vmem>>, vector<128x128xbf16>
    %cst_23 = arith.constant dense<0.000000e+00> : vector<16x128xf32>
    %39 = tpu.matmul %37, %38, %cst_23 {dimension_numbers = #tpu.dot_dimension_numbers<[1], [0], [0], [1], [0, 0, 1, 1], [], []>} : vector<16x128xbf16>, vector<128x128xbf16>, vector<16x128xf32> -> vector<16x128xf32>
    %c0_24 = arith.constant 0 : index
    %c0_25 = arith.constant 0 : index
    %40 = vector.load %arg9[%c0_24, %c0_25] : memref<1x128xf32, #tpu.memory_space<vmem>>, vector<1x128xf32>
    %41 = vector.broadcast %40 : vector<1x128xf32> to vector<16x128xf32>
    %42 = arith.addf %39, %41 : vector<16x128xf32>
    %cst_26 = arith.constant 0.000000e+00 : f32
    %43 = vector.broadcast %cst_26 : f32 to vector<16x128xf32>
    %44 = arith.subf %43, %42 : vector<16x128xf32>
    %45 = math.exp %44 : vector<16x128xf32>
    %cst_27 = arith.constant 1.000000e+00 : f32
    %46 = vector.broadcast %cst_27 : f32 to vector<16x128xf32>
    %47 = arith.addf %46, %45 : vector<16x128xf32>
    %48 = tpu.reciprocal %47 {approx = true} : vector<16x128xf32> -> vector<16x128xf32>
    %c0_28 = arith.constant 0 : index
    %c0_29 = arith.constant 0 : index
    %49 = vector.load %arg10[%c0_28, %c0_29] : memref<16x128xf32, #tpu.memory_space<vmem>>, vector<16x128xf32>
    tpu.vector_store %arg10[%c0_28, %c0_29], %48 {strides = array<i32>} : memref<16x128xf32, #tpu.memory_space<vmem>>, vector<16x128xf32>,
    return
  }
  func.func @transform_0(%arg0: i32) -> (i32, i32) {
    %c0_i32 = arith.constant 0 : i32
    %c0_i32_0 = arith.constant 0 : i32
    return %arg0, %c0_i32 : i32, i32
  }
  func.func @transform_1(%arg0: i32) -> (i32, i32) {
    %c0_i32 = arith.constant 0 : i32
    %c0_i32_0 = arith.constant 0 : i32
    %c0_i32_1 = arith.constant 0 : i32
    return %c0_i32, %c0_i32_0 : i32, i32
  }
  func.func @transform_2(%arg0: i32) -> (i32, i32) {
    %c0_i32 = arith.constant 0 : i32
    %c0_i32_0 = arith.constant 0 : i32
    %c0_i32_1 = arith.constant 0 : i32
    return %c0_i32, %c0_i32_0 : i32, i32
  }
  func.func @transform_3(%arg0: i32) -> (i32, i32) {
    %c0_i32 = arith.constant 0 : i32
    %c0_i32_0 = arith.constant 0 : i32
    %c0_i32_1 = arith.constant 0 : i32
    return %c0_i32, %c0_i32_0 : i32, i32
  }
  func.func @transform_4(%arg0: i32) -> (i32, i32) {
    %c0_i32 = arith.constant 0 : i32
    %c0_i32_0 = arith.constant 0 : i32
    %c0_i32_1 = arith.constant 0 : i32
    return %c0_i32, %c0_i32_0 : i32, i32
  }
  func.func @transform_5(%arg0: i32) -> (i32, i32) {
    %c0_i32 = arith.constant 0 : i32
    %c0_i32_0 = arith.constant 0 : i32
    %c0_i32_1 = arith.constant 0 : i32
    return %c0_i32, %c0_i32_0 : i32, i32
  }
  func.func @transform_6(%arg0: i32) -> (i32, i32) {
    %c0_i32 = arith.constant 0 : i32
    %c0_i32_0 = arith.constant 0 : i32
    %c0_i32_1 = arith.constant 0 : i32
    return %c0_i32, %c0_i32_0 : i32, i32
  }
  func.func @transform_7(%arg0: i32) -> (i32, i32) {
    %c0_i32 = arith.constant 0 : i32
    %c0_i32_0 = arith.constant 0 : i32
    %c0_i32_1 = arith.constant 0 : i32
    return %c0_i32, %c0_i32_0 : i32, i32
  }
  func.func @transform_8(%arg0: i32) -> (i32, i32) {
    %c0_i32 = arith.constant 0 : i32
    %c0_i32_0 = arith.constant 0 : i32
    %c0_i32_1 = arith.constant 0 : i32
    return %c0_i32, %c0_i32_0 : i32, i32
  }
  func.func @transform_9(%arg0: i32) -> (i32, i32) {
    %c0_i32 = arith.constant 0 : i32
    %c0_i32_0 = arith.constant 0 : i32
    return %arg0, %c0_i32 : i32, i32
  }
}

</mosaic_0001>

<llo_original>
// kernel: tpu_custom_call.1
$region0: #{tpu_custom_call.1}
  #allocation0 [shape = 'u32[]', space=smem, size = 0x4, offset = 0x4, fixed_abs, tag = 'smem constant byte address 0x4 - core index']
  #allocation1 [shape = 'u32[144,128]{1,0:T(1,128)}', space=vmem, size = 0x12000, scoped, tag = 'internal scratch']
  %s0 = inlined_call_operand.hbm [shape: f32[64,128], index: 0, kind: input, shape index: {}]
  %s1 = inlined_call_operand.hbm [shape: bf16[128,128], index: 1, kind: input, shape index: {}]
  %s2 = inlined_call_operand.vmem [shape: f32[1,128], index: 2, kind: input, shape index: {}]
  %s3 = inlined_call_operand.hbm [shape: bf16[128,128], index: 3, kind: input, shape index: {}]
  %s4 = inlined_call_operand.vmem [shape: f32[1,128], index: 4, kind: input, shape index: {}]
  %s5 = inlined_call_operand.hbm [shape: bf16[128,128], index: 5, kind: input, shape index: {}]
  %s6 = inlined_call_operand.vmem [shape: f32[1,128], index: 6, kind: input, shape index: {}]
  %s7 = inlined_call_operand.hbm [shape: bf16[128,128], index: 7, kind: input, shape index: {}]
  %s8 = inlined_call_operand.vmem [shape: f32[1,128], index: 8, kind: input, shape index: {}]
  %s9 = inlined_call_operand.hbm [shape: f32[64,128], index: 9, kind: output, shape index: {}]
  %s10 = sld [smem:[#allocation0]]
  $region89: #{tpu_custom_call.1} parent=0
    _
  %s12 = ssub.s32 1, %s10
  %s13 = scalar_select 0, %s12, %s10
  $region1: #{tpu_custom_call.1} parent=0
    #allocation2 [shape = 'u8[16384]{0}', space=vmem, size = 0x4000, scoped, tag = 'input window, operand 0']
    #allocation3 [shape = 's32[2]{0}', space=sflag, size = 0x8, scoped, tag = 'scoped memory for tpu_custom_call.1']
    #allocation4 [shape = 's32[2]{0}', space=sflag, size = 0x8, scoped, tag = 'scoped memory for tpu_custom_call.1']
    #allocation5 [shape = 'u8[32768]{0}', space=vmem, size = 0x8000, scoped, tag = 'input window, operand 1, single buffered']
    #allocation6 [shape = 's32[1]{0}', space=sflag, size = 0x4, scoped, tag = 'scoped memory for tpu_custom_call.1']
    #allocation7 [shape = 'u8[32768]{0}', space=vmem, size = 0x8000, scoped, tag = 'input window, operand 3, single buffered']
    #allocation8 [shape = 'u8[32768]{0}', space=vmem, size = 0x8000, scoped, tag = 'input window, operand 5, single buffered']
    #allocation9 [shape = 's32[1]{0}', space=sflag, size = 0x4, scoped, tag = 'scoped memory for tpu_custom_call.1']
    #allocation10 [shape = 'u8[32768]{0}', space=vmem, size = 0x8000, scoped, tag = 'input window, operand 7, single buffered']
    #allocation11 [shape = 'u8[16384]{0}', space=vmem, size = 0x4000, scoped, tag = 'output window, operand 0']
    %14 = vsyncpa [#allocation3], 0
    %s15 = scalar_lea.sflag [#allocation3], 1
    %16 = vsyncpa %s15, 0
    %17 = vsyncpa [#allocation6], 0
    %18 = vsyncpa [#allocation9], 0
    %19 = vsyncpa [#allocation4], 0
    %s20 = scalar_lea.sflag [#allocation4], 1
    %21 = vsyncpa %s20, 0
    loop: start=0, step=1, limit=6
    $region2: #{tpu_custom_call.1} parent=1 // loop_pre_header
      _
    $region3: #{tpu_custom_call.1} parent=1 // loop_header
      %s23 = sphi 0, %s27
      %p24 = scmp.ge.s32.totalorder %s23, 6
      %s33 = sphi 0, %s35
      %s36 = sphi 0, %s33
      %s37 = sphi 0, %s36
      %s53 = sphi 0, %s37
      %s57 = sphi 0, %s57
      %s59 = sphi 0, %s57
      %s60 = sphi 0, %s59
      %s74 = sphi 0, %s60
      %s78 = sphi 0, %s78
      %s80 = sphi 0, %s78
      %s81 = sphi 0, %s80
      %s95 = sphi 0, %s81
      %s99 = sphi 0, %s99
      %s101 = sphi 0, %s99
      %s102 = sphi 0, %s101
      %s116 = sphi 0, %s102
      %s120 = sphi 0, %s120
      %s122 = sphi 0, %s120
      %s123 = sphi 0, %s122
      %s137 = sphi 0, %s123
      %s141 = sphi 0, %s141
      %s143 = sphi 0, %s141
      %s144 = sphi 0, %s143
      %s158 = sphi 0, %s144
      %s162 = sphi 0, %s162
      %s164 = sphi 0, %s162
      %s165 = sphi 0, %s164
      %s179 = sphi 0, %s165
      %s183 = sphi 0, %s183
      %s185 = sphi 0, %s183
      %s186 = sphi 0, %s185
      %s200 = sphi 0, %s186
      %s204 = sphi 0, %s204
      %s206 = sphi 0, %s204
      %s207 = sphi 0, %s206
      %s221 = sphi 0, %s207
      %s227 = sphi 0, %s229
      %s230 = sphi 0, %s227
      %s231 = sphi 0, %s230
      %s247 = sphi 0, %s231
    $region4: #{tpu_custom_call.1} parent=1 // loop_header_branch
      %26 = sbr.rel (%p24) target = $region8
    $region5: #{tpu_custom_call.1} parent=1 // loop_body
      %s28 = ssub.s32 %s23, 1
      %s29 = ssub.s32 %s23, 2
      %s30 = sadd.s32 %s23, 1
      %s31 = ssub.s32 %s23, %s30
      %p32 = scmp.eq.s32.totalorder %s31, 0
      %s34 = sadd.s32 %s33, 1
      %s35 = scalar_select %p32, %s33, %s34
      %p38 = pneg %p32
      %p39 = scmp.eq.s32.totalorder %s23, 3
      %p40 = por %p38, %p39
      %p41 = scmp.ne.s32.totalorder %s33, %s36
      %p42 = scmp.eq.s32.totalorder %s23, 0
      %p43 = por %p41, %p42
      %p44 = scmp.ne.s32.totalorder %s33, %s36
      %p45 = scmp.eq.s32.totalorder %s28, 3
      %p46 = por %p44, %p45
      %p47 = scmp.ne.s32.totalorder %s36, %s37
      %p48 = scmp.eq.s32.totalorder %s28, 0
      %p49 = por %p47, %p48
      %p50 = scmp.ne.s32.totalorder %s36, %s37
      %p51 = scmp.eq.s32.totalorder %s29, 3
      %p52 = por %p50, %p51
      %p54 = scmp.ne.s32.totalorder %s37, %s53
      %p55 = scmp.eq.s32.totalorder %s29, 0
      %p56 = por %p54, %p55
      %s58 = sadd.s32 %s57, 1
      %p61 = scmp.eq.s32.totalorder %s23, 3
      %p62 = scmp.ne.s32.totalorder %s57, %s59
      %p63 = scmp.eq.s32.totalorder %s23, 0
      %p64 = por %p62, %p63
      %p65 = scmp.ne.s32.totalorder %s57, %s59
      %p66 = scmp.eq.s32.totalorder %s28, 3
      %p67 = por %p65, %p66
      %p68 = scmp.ne.s32.totalorder %s59, %s60
      %p69 = scmp.eq.s32.totalorder %s28, 0
      %p70 = por %p68, %p69
      %p71 = scmp.ne.s32.totalorder %s59, %s60
      %p72 = scmp.eq.s32.totalorder %s29, 3
      %p73 = por %p71, %p72
      %p75 = scmp.ne.s32.totalorder %s60, %s74
      %p76 = scmp.eq.s32.totalorder %s29, 0
      %p77 = por %p75, %p76
      %s79 = sadd.s32 %s78, 1
      %p82 = scmp.eq.s32.totalorder %s23, 3
      %p83 = scmp.ne.s32.totalorder %s78, %s80
      %p84 = scmp.eq.s32.totalorder %s23, 0
      %p85 = por %p83, %p84
      %p86 = scmp.ne.s32.totalorder %s78, %s80
      %p87 = scmp.eq.s32.totalorder %s28, 3
      %p88 = por %p86, %p87
      %p89 = scmp.ne.s32.totalorder %s80, %s81
      %p90 = scmp.eq.s32.totalorder %s28, 0
      %p91 = por %p89, %p90
      %p92 = scmp.ne.s32.totalorder %s80, %s81
      %p93 = scmp.eq.s32.totalorder %s29, 3
      %p94 = por %p92, %p93
      %p96 = scmp.ne.s32.totalorder %s81, %s95
      %p97 = scmp.eq.s32.totalorder %s29, 0
      %p98 = por %p96, %p97
      %s100 = sadd.s32 %s99, 1
      %p103 = scmp.eq.s32.totalorder %s23, 3
      %p104 = scmp.ne.s32.totalorder %s99, %s101
      %p105 = scmp.eq.s32.totalorder %s23, 0
      %p106 = por %p104, %p105
      %p107 = scmp.ne.s32.totalorder %s99, %s101
      %p108 = scmp.eq.s32.totalorder %s28, 3
      %p109 = por %p107, %p108
      %p110 = scmp.ne.s32.totalorder %s101, %s102
      %p111 = scmp.eq.s32.totalorder %s28, 0
      %p112 = por %p110, %p111
      %p113 = scmp.ne.s32.totalorder %s101, %s102
      %p114 = scmp.eq.s32.totalorder %s29, 3
      %p115 = por %p113, %p114
      %p117 = scmp.ne.s32.totalorder %s102, %s116
      %p118 = scmp.eq.s32.totalorder %s29, 0
      %p119 = por %p117, %p118
      %s121 = sadd.s32 %s120, 1
      %p124 = scmp.eq.s32.totalorder %s23, 3
      %p125 = scmp.ne.s32.totalorder %s120, %s122
      %p126 = scmp.eq.s32.totalorder %s23, 0
      %p127 = por %p125, %p126
      %p128 = scmp.ne.s32.totalorder %s120, %s122
      %p129 = scmp.eq.s32.totalorder %s28, 3
      %p130 = por %p128, %p129
      %p131 = scmp.ne.s32.totalorder %s122, %s123
      %p132 = scmp.eq.s32.totalorder %s28, 0
      %p133 = por %p131, %p132
      %p134 = scmp.ne.s32.totalorder %s122, %s123
      %p135 = scmp.eq.s32.totalorder %s29, 3
      %p136 = por %p134, %p135
      %p138 = scmp.ne.s32.totalorder %s123, %s137
      %p139 = scmp.eq.s32.totalorder %s29, 0
      %p140 = por %p138, %p139
      %s142 = sadd.s32 %s141, 1
      %p145 = scmp.eq.s32.totalorder %s23, 3
      %p146 = scmp.ne.s32.totalorder %s141, %s143
      %p147 = scmp.eq.s32.totalorder %s23, 0
      %p148 = por %p146, %p147
      %p149 = scmp.ne.s32.totalorder %s141, %s143
      %p150 = scmp.eq.s32.totalorder %s28, 3
      %p151 = por %p149, %p150
      %p152 = scmp.ne.s32.totalorder %s143, %s144
      %p153 = scmp.eq.s32.totalorder %s28, 0
      %p154 = por %p152, %p153
      %p155 = scmp.ne.s32.totalorder %s143, %s144
      %p156 = scmp.eq.s32.totalorder %s29, 3
      %p157 = por %p155, %p156
      %p159 = scmp.ne.s32.totalorder %s144, %s158
      %p160 = scmp.eq.s32.totalorder %s29, 0
      %p161 = por %p159, %p160
      %s163 = sadd.s32 %s162, 1
      %p166 = scmp.eq.s32.totalorder %s23, 3
      %p167 = scmp.ne.s32.totalorder %s162, %s164
      %p168 = scmp.eq.s32.totalorder %s23, 0
      %p169 = por %p167, %p168
      %p170 = scmp.ne.s32.totalorder %s162, %s164
      %p171 = scmp.eq.s32.totalorder %s28, 3
      %p172 = por %p170, %p171
      %p173 = scmp.ne.s32.totalorder %s164, %s165
      %p174 = scmp.eq.s32.totalorder %s28, 0
      %p175 = por %p173, %p174
      %p176 = scmp.ne.s32.totalorder %s164, %s165
      %p177 = scmp.eq.s32.totalorder %s29, 3
      %p178 = por %p176, %p177
      %p180 = scmp.ne.s32.totalorder %s165, %s179
      %p181 = scmp.eq.s32.totalorder %s29, 0
      %p182 = por %p180, %p181
      %s184 = sadd.s32 %s183, 1
      %p187 = scmp.eq.s32.totalorder %s23, 3
      %p188 = scmp.ne.s32.totalorder %s183, %s185
      %p189 = scmp.eq.s32.totalorder %s23, 0
      %p190 = por %p188, %p189
      %p191 = scmp.ne.s32.totalorder %s183, %s185
      %p192 = scmp.eq.s32.totalorder %s28, 3
      %p193 = por %p191, %p192
      %p194 = scmp.ne.s32.totalorder %s185, %s186
      %p195 = scmp.eq.s32.totalorder %s28, 0
      %p196 = por %p194, %p195
      %p197 = scmp.ne.s32.totalorder %s185, %s186
      %p198 = scmp.eq.s32.totalorder %s29, 3
      %p199 = por %p197, %p198
      %p201 = scmp.ne.s32.totalorder %s186, %s200
      %p202 = scmp.eq.s32.totalorder %s29, 0
      %p203 = por %p201, %p202
      %s205 = sadd.s32 %s204, 1
      %p208 = scmp.eq.s32.totalorder %s23, 3
      %p209 = scmp.ne.s32.totalorder %s204, %s206
      %p210 = scmp.eq.s32.totalorder %s23, 0
      %p211 = por %p209, %p210
      %p212 = scmp.ne.s32.totalorder %s204, %s206
      %p213 = scmp.eq.s32.totalorder %s28, 3
      %p214 = por %p212, %p213
      %p215 = scmp.ne.s32.totalorder %s206, %s207
      %p216 = scmp.eq.s32.totalorder %s28, 0
      %p217 = por %p215, %p216
      %p218 = scmp.ne.s32.totalorder %s206, %s207
      %p219 = scmp.eq.s32.totalorder %s29, 3
      %p220 = por %p218, %p219
      %p222 = scmp.ne.s32.totalorder %s207, %s221
      %p223 = scmp.eq.s32.totalorder %s29, 0
      %p224 = por %p222, %p223
      %s225 = ssub.s32 %s23, %s30
      %p226 = scmp.eq.s32.totalorder %s225, 0
      %s228 = sadd.s32 %s227, 1
      %s229 = scalar_select %p226, %s227, %s228
      %p232 = pneg %p226
      %p233 = scmp.eq.s32.totalorder %s23, 3
      %p234 = por %p232, %p233
      %p235 = scmp.ne.s32.totalorder %s227, %s230
      %p236 = scmp.eq.s32.totalorder %s23, 0
      %p237 = por %p235, %p236
      %p238 = scmp.ne.s32.totalorder %s227, %s230
      %p239 = scmp.eq.s32.totalorder %s28, 3
      %p240 = por %p238, %p239
      %p241 = scmp.ne.s32.totalorder %s230, %s231
      %p242 = scmp.eq.s32.totalorder %s28, 0
      %p243 = por %p241, %p242
      %p244 = scmp.ne.s32.totalorder %s230, %s231
      %p245 = scmp.eq.s32.totalorder %s29, 3
      %p246 = por %p244, %p245
      %p248 = scmp.ne.s32.totalorder %s231, %s247
      %p249 = scmp.eq.s32.totalorder %s29, 0
      %p250 = por %p248, %p249
      %p251 = scmp.le.s32.totalorder 1, %s23
      %p252 = scmp.lt.s32.totalorder %s23, 5
      %p253 = pnand %p251, %p252
      %p254 = pneg %p253
      // Predicated region
      $region9: #{tpu_custom_call.1} parent=5 // pred_check
        _
      $region10: #{tpu_custom_call.1} parent=5 // pred_check_branch
        %256 = sbr.rel (%p253) target = $region12
      $region11: #{tpu_custom_call.1} parent=5 // pred_region
        %s257 = ssub.s32 %s23, 1
        // Predicated region
        $region13: #{tpu_custom_call.1} parent=11 // pred_check
          %p258 = pneg %p70
        $region14: #{tpu_custom_call.1} parent=11 // pred_check_branch
          %260 = sbr.rel (%p258) target = $region16
        $region15: #{tpu_custom_call.1} parent=11 // pred_region
          %s262 = ssub.s32 1024, 1024
          %263 = vsyncadd [#allocation6], %s262
          %s264 = sshll.u32 [#allocation5], 4
          %s265 = int_to_ptr.vmem [resolvable:$true] %s264
          %270 = dma.hbm_to_vmem [thread:$0]  %s1, 1024, %s265, [#allocation6], 64, 64, 4
        $region16: #{tpu_custom_call.1} parent=11 // pred_fallthru
          _
        // Predicated region
        $region17: #{tpu_custom_call.1} parent=11 // pred_check
          %p271 = pneg %p91
        $region18: #{tpu_custom_call.1} parent=11 // pred_check_branch
          %273 = sbr.rel (%p271) target = $region20
        $region19: #{tpu_custom_call.1} parent=11 // pred_region
          _
        $region20: #{tpu_custom_call.1} parent=11 // pred_fallthru
          _
        // Predicated region
        $region21: #{tpu_custom_call.1} parent=11 // pred_check
          %p274 = pneg %p112
        $region22: #{tpu_custom_call.1} parent=11 // pred_check_branch
          %276 = sbr.rel (%p274) target = $region24
        $region23: #{tpu_custom_call.1} parent=11 // pred_region
          %s278 = ssub.s32 1024, 1024
          %279 = vsyncadd [#allocation6], %s278
          %s280 = sshll.u32 [#allocation7], 4
          %s281 = int_to_ptr.vmem [resolvable:$true] %s280
          %286 = dma.hbm_to_vmem [thread:$0]  %s3, 1024, %s281, [#allocation6], 64, 64, 4
        $region24: #{tpu_custom_call.1} parent=11 // pred_fallthru
          _
        // Predicated region
        $region25: #{tpu_custom_call.1} parent=11 // pred_check
          %p287 = pneg %p133
        $region26: #{tpu_custom_call.1} parent=11 // pred_check_branch
          %289 = sbr.rel (%p287) target = $region28
        $region27: #{tpu_custom_call.1} parent=11 // pred_region
          _
        $region28: #{tpu_custom_call.1} parent=11 // pred_fallthru
          _
        // Predicated region
        $region29: #{tpu_custom_call.1} parent=11 // pred_check
          %p290 = pneg %p154
        $region30: #{tpu_custom_call.1} parent=11 // pred_check_branch
          %292 = sbr.rel (%p290) target = $region32
        $region31: #{tpu_custom_call.1} parent=11 // pred_region
          %s294 = ssub.s32 1024, 1024
          %295 = vsyncadd [#allocation9], %s294
          %s296 = sshll.u32 [#allocation8], 4
          %s297 = int_to_ptr.vmem [resolvable:$true] %s296
          %302 = dma.hbm_to_vmem [thread:$0]  %s5, 1024, %s297, [#allocation9], 64, 64, 4
        $region32: #{tpu_custom_call.1} parent=11 // pred_fallthru
          _
        // Predicated region
        $region33: #{tpu_custom_call.1} parent=11 // pred_check
          %p303 = pneg %p175
        $region34: #{tpu_custom_call.1} parent=11 // pred_check_branch
          %305 = sbr.rel (%p303) target = $region36
        $region35: #{tpu_custom_call.1} parent=11 // pred_region
          _
        $region36: #{tpu_custom_call.1} parent=11 // pred_fallthru
          _
        // Predicated region
        $region37: #{tpu_custom_call.1} parent=11 // pred_check
          %p306 = pneg %p196
        $region38: #{tpu_custom_call.1} parent=11 // pred_check_branch
          %308 = sbr.rel (%p306) target = $region40
        $region39: #{tpu_custom_call.1} parent=11 // pred_region
          %s310 = ssub.s32 1024, 1024
          %311 = vsyncadd [#allocation9], %s310
          %s312 = sshll.u32 [#allocation10], 4
          %s313 = int_to_ptr.vmem [resolvable:$true] %s312
          %318 = dma.hbm_to_vmem [thread:$0]  %s7, 1024, %s313, [#allocation9], 64, 64, 4
        $region40: #{tpu_custom_call.1} parent=11 // pred_fallthru
          _
        // Predicated region
        $region41: #{tpu_custom_call.1} parent=11 // pred_check
          %p319 = pneg %p217
        $region42: #{tpu_custom_call.1} parent=11 // pred_check_branch
          %321 = sbr.rel (%p319) target = $region44
        $region43: #{tpu_custom_call.1} parent=11 // pred_region
          _
        $region44: #{tpu_custom_call.1} parent=11 // pred_fallthru
          _
      $region12: #{tpu_custom_call.1} parent=5 // pred_fallthru
        _
      %p322 = scmp.lt.s32.totalorder %s23, 4
      // Predicated region
      $region45: #{tpu_custom_call.1} parent=5 // pred_check
        %p323 = pneg %p322
      $region46: #{tpu_custom_call.1} parent=5 // pred_check_branch
        %325 = sbr.rel (%p323) target = $region48
      $region47: #{tpu_custom_call.1} parent=5 // pred_region
        // Predicated region
        $region49: #{tpu_custom_call.1} parent=47 // pred_check
          %p326 = pneg %p43
        $region50: #{tpu_custom_call.1} parent=47 // pred_check_branch
          %328 = sbr.rel (%p326) target = $region52
        $region51: #{tpu_custom_call.1} parent=47 // pred_region
          %s329 = sand.u32 %s33, 1
          %s330 = scalar_lea.sflag [#allocation3], %s329
          %s331 = sand.u32 %s33, 1
          %s332 = smul.addr %s331, 16
          %s333 = scalar_lea.vmem [#allocation2], %s332
          %s334 = smul.u32 2, %s23
          %s336 = ssub.s32 256, 256
          %337 = vsyncadd %s330, %s336
          %s338 = smul.addr %s334, 128
          %s339 = scalar_lea.hbm %s0, %s338
          %s340 = sshll.u32 %s333, 4
          %s341 = int_to_ptr.vmem [resolvable:$true] %s340
          %346 = dma.hbm_to_vmem [thread:$0]  %s339, 256, %s341, %s330, 128, 128, 8
        $region52: #{tpu_custom_call.1} parent=47 // pred_fallthru
          _
      $region48: #{tpu_custom_call.1} parent=5 // pred_fallthru
        _
      %p347 = scmp.le.s32.totalorder 1, %s23
      %p348 = scmp.lt.s32.totalorder %s23, 5
      %p349 = pnand %p347, %p348
      %p350 = pneg %p349
      // Predicated region
      $region53: #{tpu_custom_call.1} parent=5 // pred_check
        _
      $region54: #{tpu_custom_call.1} parent=5 // pred_check_branch
        %352 = sbr.rel (%p349) target = $region56
      $region55: #{tpu_custom_call.1} parent=5 // pred_region
        %s353 = ssub.s32 %s23, 1
        %s354 = sand.u32 %s36, 1
        %s355 = scalar_lea.sflag [#allocation3], %s354
        %s356 = sand.u32 %s36, 1
        %s357 = smul.addr %s356, 16
        %s358 = scalar_lea.vmem [#allocation2], %s357
        // Predicated region
        $region57: #{tpu_custom_call.1} parent=55 // pred_check
          %p359 = pneg %p49
        $region58: #{tpu_custom_call.1} parent=55 // pred_check_branch
          %361 = sbr.rel (%p359) target = $region60
        $region59: #{tpu_custom_call.1} parent=55 // pred_region
          %362 = dma.done %s355, 256
        $region60: #{tpu_custom_call.1} parent=55 // pred_fallthru
          _
        // Predicated region
        $region61: #{tpu_custom_call.1} parent=55 // pred_check
          %p363 = pneg %p70
        $region62: #{tpu_custom_call.1} parent=55 // pred_check_branch
          %365 = sbr.rel (%p363) target = $region64
        $region63: #{tpu_custom_call.1} parent=55 // pred_region
          %366 = dma.done [#allocation6], 1024
        $region64: #{tpu_custom_call.1} parent=55 // pred_fallthru
          _
        // Predicated region
        $region65: #{tpu_custom_call.1} parent=55 // pred_check
          %p367 = pneg %p112
        $region66: #{tpu_custom_call.1} parent=55 // pred_check_branch
          %369 = sbr.rel (%p367) target = $region68
        $region67: #{tpu_custom_call.1} parent=55 // pred_region
          %370 = dma.done [#allocation6], 1024
        $region68: #{tpu_custom_call.1} parent=55 // pred_fallthru
          _
        // Predicated region
        $region69: #{tpu_custom_call.1} parent=55 // pred_check
          %p371 = pneg %p154
        $region70: #{tpu_custom_call.1} parent=55 // pred_check_branch
          %373 = sbr.rel (%p371) target = $region72
        $region71: #{tpu_custom_call.1} parent=55 // pred_region
          %374 = dma.done [#allocation9], 1024
        $region72: #{tpu_custom_call.1} parent=55 // pred_fallthru
          _
        // Predicated region
        $region73: #{tpu_custom_call.1} parent=55 // pred_check
          %p375 = pneg %p196
        $region74: #{tpu_custom_call.1} parent=55 // pred_check_branch
          %377 = sbr.rel (%p375) target = $region76
        $region75: #{tpu_custom_call.1} parent=55 // pred_region
          %378 = dma.done [#allocation9], 1024
        $region76: #{tpu_custom_call.1} parent=55 // pred_fallthru
          _
        %s379 = sand.u32 %s36, 1
        %s380 = scalar_lea.sflag [#allocation3], %s379
        %s381 = sand.u32 %s36, 1
        %s382 = smul.addr %s381, 16
        %s383 = scalar_lea.vmem [#allocation2], %s382
        %p384 = pneg %p49
        %p385 = pneg %p46
        %p386 = pneg %p70
        %p387 = pneg %p67
        %p388 = pneg %p91
        %p389 = pneg %p88
        %p390 = pneg %p112
        %p391 = pneg %p109
        %p392 = pneg %p133
        %p393 = pneg %p130
        %p394 = pneg %p154
        %p395 = pneg %p151
        %p396 = pneg %p175
        %p397 = pneg %p172
        %p398 = pneg %p196
        %p399 = pneg %p193
        %p400 = pneg %p217
        %p401 = pneg %p214
        %p402 = pneg %p243
        %p403 = pneg %p240
        %s404 = sand.u32 %s230, 1
        %s405 = scalar_lea.sflag [#allocation4], %s404
        %s406 = sand.u32 %s230, 1
        %s407 = smul.addr %s406, 16
        %s408 = scalar_lea.vmem [#allocation11], %s407
        %s409 = smul.u32 2, %s28
        %s410 = smul.u32 2, %s28
        %v412 = vld [vmem:[%s358] sm:$0xff]
        %v413 = vld [vmem:[%s358 + $0x8] sm:$0xff]
        %v414 = vpack.c.bf16 %v413, %v412
        %v415 = vld [vmem:[#allocation5] sm:$0xf]
        %v416 = vld [vmem:[#allocation5 + $0x4] sm:$0xf]
        %v417 = vld [vmem:[#allocation5 + $0x8] sm:$0xf]
        %v418 = vld [vmem:[#allocation5 + $0xc] sm:$0xf]
        %v419 = vld [vmem:[#allocation5 + $0x10] sm:$0xf]
        %v420 = vld [vmem:[#allocation5 + $0x14] sm:$0xf]
        %v421 = vld [vmem:[#allocation5 + $0x18] sm:$0xf]
        %v422 = vld [vmem:[#allocation5 + $0x1c] sm:$0xf]
        %v423 = vld [vmem:[#allocation5 + $0x20] sm:$0xf]
        %v424 = vld [vmem:[#allocation5 + $0x24] sm:$0xf]
        %v425 = vld [vmem:[#allocation5 + $0x28] sm:$0xf]
        %v426 = vld [vmem:[#allocation5 + $0x2c] sm:$0xf]
        %v427 = vld [vmem:[#allocation5 + $0x30] sm:$0xf]
        %v428 = vld [vmem:[#allocation5 + $0x34] sm:$0xf]
        %v429 = vld [vmem:[#allocation5 + $0x38] sm:$0xf]
        %v430 = vld [vmem:[#allocation5 + $0x3c] sm:$0xf]
        %v431 = vld [vmem:[%s2] sm:$0x1]
        %v433 = vlaneseq
        %v434 = vshrl.u32 %v433, 7
        %v435 = vsub.s32 0, %v434
        %v436 = vrot.slane %v431, %v435
        %v454 = vunpack.c.l.b16 %v415
        %v455 = vunpack.c.l.b16 %v416
        %v456 = vunpack.c.l.b16 %v417
        %v457 = vunpack.c.l.b16 %v418
        %v458 = vunpack.c.l.b16 %v419
        %v459 = vunpack.c.l.b16 %v420
        %v460 = vunpack.c.l.b16 %v421
        %v461 = vunpack.c.l.b16 %v422
        %v462 = vunpack.c.l.b16 %v423
        %v463 = vunpack.c.l.b16 %v424
        %v464 = vunpack.c.l.b16 %v425
        %v465 = vunpack.c.l.b16 %v426
        %v466 = vunpack.c.l.b16 %v427
        %v467 = vunpack.c.l.b16 %v428
        %v468 = vunpack.c.l.b16 %v429
        %v469 = vunpack.c.l.b16 %v430
        %v470 = vpack.c.b16 %v455, %v454
        %v471 = vpack.c.b16 %v457, %v456
        %v472 = vpack.c.b16 %v459, %v458
        %v473 = vpack.c.b16 %v461, %v460
        %v474 = vpack.c.b16 %v463, %v462
        %v475 = vpack.c.b16 %v465, %v464
        %v476 = vpack.c.b16 %v467, %v466
        %v477 = vpack.c.b16 %v469, %v468
        %486 = vmatprep.subr.bf16.mxu0 0
        %487 = vmatpush1.bf16.msra.mxu0 %v470
        %488 = vmatprep.subr.bf16.mxu0 0
        %489 = vmatpush1.bf16.msra.mxu0 %v471
        %490 = vmatprep.subr.bf16.mxu0 0
        %491 = vmatpush1.bf16.msra.mxu0 %v472
        %492 = vmatprep.subr.bf16.mxu0 0
        %493 = vmatpush1.bf16.msra.mxu0 %v473
        %494 = vmatprep.subr.bf16.mxu0 0
        %495 = vmatpush1.bf16.msra.mxu0 %v474
        %496 = vmatprep.subr.bf16.mxu0 0
        %497 = vmatpush1.bf16.msra.mxu0 %v475
        %498 = vmatprep.subr.bf16.mxu0 0
        %499 = vmatpush1.bf16.msra.mxu0 %v476
        %500 = vmatprep.subr.bf16.mxu0 0
        %501 = vmatpush1.bf16.msra.mxu0 %v477
        %502 = vmatprep.subr.bf16.mxu0 0
        %503 = vmatpush1.bf16.msra.mxu0 0
        %504 = vmatprep.subr.bf16.mxu0 0
        %505 = vmatpush1.bf16.msra.mxu0 0
        %506 = vmatprep.subr.bf16.mxu0 0
        %507 = vmatpush1.bf16.msra.mxu0 0
        %508 = vmatprep.subr.bf16.mxu0 0
        %509 = vmatpush1.bf16.msra.mxu0 0
        %510 = vmatprep.subr.bf16.mxu0 0
        %511 = vmatpush1.bf16.msra.mxu0 0
        %512 = vmatprep.subr.bf16.mxu0 0
        %513 = vmatpush1.bf16.msra.mxu0 0
        %514 = vmatprep.subr.bf16.mxu0 0
        %515 = vmatpush1.bf16.msra.mxu0 0
        %516 = vmatprep.subr.bf16.mxu0 0
        %517 = vmatpush1.bf16.msra.mxu0 0
        %518 = vmatprep.mubr.bf16.mxu0 0
        %519 = vmatmul.mubr.bf16.gmra.mrb[0].mxu0 %v414
        %v520 = vpop.f32.mrb[0].mxu0
        %v521 = vadd.f32 %v436, %v520
        %v522 = vpop.f32.mrb[0].mxu0
        %v523 = vpop.f32.mrb[0].mxu0
        %v524 = vadd.f32 %v436, %v523
        %v525 = vpop.f32.mrb[0].mxu0
        %526 = vdwg.mxu0
        %v527 = vsub.f32 0.0, %v521
        %v528 = vsub.f32 0.0, %v524
        %v529 = vmul.f32 %v527, 1.442695
        %v530 = vpow.pop %v529
        %v531 = vmul.f32 %v528, 1.442695
        %v532 = vpow.pop %v531
        %v533 = vadd.f32 %v530, 1.0
        %v534 = vadd.f32 %v532, 1.0
        %v535 = vrcp.pop %v533
        %v536 = vrcp.pop %v534
        %v537 = vpack.c.bf16 %v536, %v535
        %v538 = vld [vmem:[#allocation7] sm:$0xf]
        %v539 = vld [vmem:[#allocation7 + $0x4] sm:$0xf]
        %v540 = vld [vmem:[#allocation7 + $0x8] sm:$0xf]
        %v541 = vld [vmem:[#allocation7 + $0xc] sm:$0xf]
        %v542 = vld [vmem:[#allocation7 + $0x10] sm:$0xf]
        %v543 = vld [vmem:[#allocation7 + $0x14] sm:$0xf]
        %v544 = vld [vmem:[#allocation7 + $0x18] sm:$0xf]
        %v545 = vld [vmem:[#allocation7 + $0x1c] sm:$0xf]
        %v546 = vld [vmem:[#allocation7 + $0x20] sm:$0xf]
        %v547 = vld [vmem:[#allocation7 + $0x24] sm:$0xf]
        %v548 = vld [vmem:[#allocation7 + $0x28] sm:$0xf]
        %v549 = vld [vmem:[#allocation7 + $0x2c] sm:$0xf]
        %v550 = vld [vmem:[#allocation7 + $0x30] sm:$0xf]
        %v551 = vld [vmem:[#allocation7 + $0x34] sm:$0xf]
        %v552 = vld [vmem:[#allocation7 + $0x38] sm:$0xf]
        %v553 = vld [vmem:[#allocation7 + $0x3c] sm:$0xf]
        %v554 = vld [vmem:[%s4] sm:$0x1]
        %v556 = vlaneseq
        %v557 = vshrl.u32 %v556, 7
        %v558 = vsub.s32 0, %v557
        %v559 = vrot.slane %v554, %v558
        %v577 = vunpack.c.l.b16 %v538
        %v578 = vunpack.c.l.b16 %v539
        %v579 = vunpack.c.l.b16 %v540
        %v580 = vunpack.c.l.b16 %v541
        %v581 = vunpack.c.l.b16 %v542
        %v582 = vunpack.c.l.b16 %v543
        %v583 = vunpack.c.l.b16 %v544
        %v584 = vunpack.c.l.b16 %v545
        %v585 = vunpack.c.l.b16 %v546
        %v586 = vunpack.c.l.b16 %v547
        %v587 = vunpack.c.l.b16 %v548
        %v588 = vunpack.c.l.b16 %v549
        %v589 = vunpack.c.l.b16 %v550
        %v590 = vunpack.c.l.b16 %v551
        %v591 = vunpack.c.l.b16 %v552
        %v592 = vunpack.c.l.b16 %v553
        %v593 = vpack.c.b16 %v578, %v577
        %v594 = vpack.c.b16 %v580, %v579
        %v595 = vpack.c.b16 %v582, %v581
        %v596 = vpack.c.b16 %v584, %v583
        %v597 = vpack.c.b16 %v586, %v585
        %v598 = vpack.c.b16 %v588, %v587
        %v599 = vpack.c.b16 %v590, %v589
        %v600 = vpack.c.b16 %v592, %v591
        %609 = vmatprep.subr.bf16.mxu0 0
        %610 = vmatpush1.bf16.msra.mxu0 %v593
        %611 = vmatprep.subr.bf16.mxu0 0
        %612 = vmatpush1.bf16.msra.mxu0 %v594
        %613 = vmatprep.subr.bf16.mxu0 0
        %614 = vmatpush1.bf16.msra.mxu0 %v595
        %615 = vmatprep.subr.bf16.mxu0 0
        %616 = vmatpush1.bf16.msra.mxu0 %v596
        %617 = vmatprep.subr.bf16.mxu0 0
        %618 = vmatpush1.bf16.msra.mxu0 %v597
        %619 = vmatprep.subr.bf16.mxu0 0
        %620 = vmatpush1.bf16.msra.mxu0 %v598
        %621 = vmatprep.subr.bf16.mxu0 0
        %622 = vmatpush1.bf16.msra.mxu0 %v599
        %623 = vmatprep.subr.bf16.mxu0 0
        %624 = vmatpush1.bf16.msra.mxu0 %v600
        %625 = vmatprep.subr.bf16.mxu0 0
        %626 = vmatpush1.bf16.msra.mxu0 0
        %627 = vmatprep.subr.bf16.mxu0 0
        %628 = vmatpush1.bf16.msra.mxu0 0
        %629 = vmatprep.subr.bf16.mxu0 0
        %630 = vmatpush1.bf16.msra.mxu0 0
        %631 = vmatprep.subr.bf16.mxu0 0
        %632 = vmatpush1.bf16.msra.mxu0 0
        %633 = vmatprep.subr.bf16.mxu0 0
        %634 = vmatpush1.bf16.msra.mxu0 0
        %635 = vmatprep.subr.bf16.mxu0 0
        %636 = vmatpush1.bf16.msra.mxu0 0
        %637 = vmatprep.subr.bf16.mxu0 0
        %638 = vmatpush1.bf16.msra.mxu0 0
        %639 = vmatprep.subr.bf16.mxu0 0
        %640 = vmatpush1.bf16.msra.mxu0 0
        %641 = vmatprep.mubr.bf16.mxu0 0
        %642 = vmatmul.mubr.bf16.gmra.mrb[0].mxu0 %v537
        %v643 = vpop.f32.mrb[0].mxu0
        %v644 = vadd.f32 %v559, %v643
        %v645 = vpop.f32.mrb[0].mxu0
        %v646 = vpop.f32.mrb[0].mxu0
        %v647 = vadd.f32 %v559, %v646
        %v648 = vpop.f32.mrb[0].mxu0
        %649 = vdwg.mxu0
        %v650 = vsub.f32 0.0, %v644
        %v651 = vsub.f32 0.0, %v647
        %v652 = vmul.f32 %v650, 1.442695
        %v653 = vpow.pop %v652
        %v654 = vmul.f32 %v651, 1.442695
        %v655 = vpow.pop %v654
        %v656 = vadd.f32 %v653, 1.0
        %v657 = vadd.f32 %v655, 1.0
        %v658 = vrcp.pop %v656
        %v659 = vrcp.pop %v657
        %v660 = vpack.c.bf16 %v659, %v658
        %v661 = vld [vmem:[#allocation8] sm:$0xf]
        %v662 = vld [vmem:[#allocation8 + $0x4] sm:$0xf]
        %v663 = vld [vmem:[#allocation8 + $0x8] sm:$0xf]
        %v664 = vld [vmem:[#allocation8 + $0xc] sm:$0xf]
        %v665 = vld [vmem:[#allocation8 + $0x10] sm:$0xf]
        %v666 = vld [vmem:[#allocation8 + $0x14] sm:$0xf]
        %v667 = vld [vmem:[#allocation8 + $0x18] sm:$0xf]
        %v668 = vld [vmem:[#allocation8 + $0x1c] sm:$0xf]
        %v669 = vld [vmem:[#allocation8 + $0x20] sm:$0xf]
        %v670 = vld [vmem:[#allocation8 + $0x24] sm:$0xf]
        %v671 = vld [vmem:[#allocation8 + $0x28] sm:$0xf]
        %v672 = vld [vmem:[#allocation8 + $0x2c] sm:$0xf]
        %v673 = vld [vmem:[#allocation8 + $0x30] sm:$0xf]
        %v674 = vld [vmem:[#allocation8 + $0x34] sm:$0xf]
        %v675 = vld [vmem:[#allocation8 + $0x38] sm:$0xf]
        %v676 = vld [vmem:[#allocation8 + $0x3c] sm:$0xf]
        %v677 = vld [vmem:[%s6] sm:$0x1]
        %v679 = vlaneseq
        %v680 = vshrl.u32 %v679, 7
        %v681 = vsub.s32 0, %v680
        %v682 = vrot.slane %v677, %v681
        %v700 = vunpack.c.l.b16 %v661
        %v701 = vunpack.c.l.b16 %v662
        %v702 = vunpack.c.l.b16 %v663
        %v703 = vunpack.c.l.b16 %v664
        %v704 = vunpack.c.l.b16 %v665
        %v705 = vunpack.c.l.b16 %v666
        %v706 = vunpack.c.l.b16 %v667
        %v707 = vunpack.c.l.b16 %v668
        %v708 = vunpack.c.l.b16 %v669
        %v709 = vunpack.c.l.b16 %v670
        %v710 = vunpack.c.l.b16 %v671
        %v711 = vunpack.c.l.b16 %v672
        %v712 = vunpack.c.l.b16 %v673
        %v713 = vunpack.c.l.b16 %v674
        %v714 = vunpack.c.l.b16 %v675
        %v715 = vunpack.c.l.b16 %v676
        %v716 = vpack.c.b16 %v701, %v700
        %v717 = vpack.c.b16 %v703, %v702
        %v718 = vpack.c.b16 %v705, %v704
        %v719 = vpack.c.b16 %v707, %v706
        %v720 = vpack.c.b16 %v709, %v708
        %v721 = vpack.c.b16 %v711, %v710
        %v722 = vpack.c.b16 %v713, %v712
        %v723 = vpack.c.b16 %v715, %v714
        %732 = vmatprep.subr.bf16.mxu0 0
        %733 = vmatpush1.bf16.msra.mxu0 %v716
        %734 = vmatprep.subr.bf16.mxu0 0
        %735 = vmatpush1.bf16.msra.mxu0 %v717
        %736 = vmatprep.subr.bf16.mxu0 0
        %737 = vmatpush1.bf16.msra.mxu0 %v718
        %738 = vmatprep.subr.bf16.mxu0 0
        %739 = vmatpush1.bf16.msra.mxu0 %v719
        %740 = vmatprep.subr.bf16.mxu0 0
        %741 = vmatpush1.bf16.msra.mxu0 %v720
        %742 = vmatprep.subr.bf16.mxu0 0
        %743 = vmatpush1.bf16.msra.mxu0 %v721
        %744 = vmatprep.subr.bf16.mxu0 0
        %745 = vmatpush1.bf16.msra.mxu0 %v722
        %746 = vmatprep.subr.bf16.mxu0 0
        %747 = vmatpush1.bf16.msra.mxu0 %v723
        %748 = vmatprep.subr.bf16.mxu0 0
        %749 = vmatpush1.bf16.msra.mxu0 0
        %750 = vmatprep.subr.bf16.mxu0 0
        %751 = vmatpush1.bf16.msra.mxu0 0
        %752 = vmatprep.subr.bf16.mxu0 0
        %753 = vmatpush1.bf16.msra.mxu0 0
        %754 = vmatprep.subr.bf16.mxu0 0
        %755 = vmatpush1.bf16.msra.mxu0 0
        %756 = vmatprep.subr.bf16.mxu0 0
        %757 = vmatpush1.bf16.msra.mxu0 0
        %758 = vmatprep.subr.bf16.mxu0 0
        %759 = vmatpush1.bf16.msra.mxu0 0
        %760 = vmatprep.subr.bf16.mxu0 0
        %761 = vmatpush1.bf16.msra.mxu0 0
        %762 = vmatprep.subr.bf16.mxu0 0
        %763 = vmatpush1.bf16.msra.mxu0 0
        %764 = vmatprep.mubr.bf16.mxu0 0
        %765 = vmatmul.mubr.bf16.gmra.mrb[0].mxu0 %v660
        %v766 = vpop.f32.mrb[0].mxu0
        %v767 = vadd.f32 %v682, %v766
        %v768 = vpop.f32.mrb[0].mxu0
        %v769 = vpop.f32.mrb[0].mxu0
        %v770 = vadd.f32 %v682, %v769
        %v771 = vpop.f32.mrb[0].mxu0
        %772 = vdwg.mxu0
        %v773 = vsub.f32 0.0, %v767
        %v774 = vsub.f32 0.0, %v770
        %v775 = vmul.f32 %v773, 1.442695
        %v776 = vpow.pop %v775
        %v777 = vmul.f32 %v774, 1.442695
        %v778 = vpow.pop %v777
        %v779 = vadd.f32 %v776, 1.0
        %v780 = vadd.f32 %v778, 1.0
        %v781 = vrcp.pop %v779
        %v782 = vrcp.pop %v780
        %v783 = vpack.c.bf16 %v782, %v781
        %v784 = vld [vmem:[#allocation10] sm:$0xf]
        %v785 = vld [vmem:[#allocation10 + $0x4] sm:$0xf]
        %v786 = vld [vmem:[#allocation10 + $0x8] sm:$0xf]
        %v787 = vld [vmem:[#allocation10 + $0xc] sm:$0xf]
        %v788 = vld [vmem:[#allocation10 + $0x10] sm:$0xf]
        %v789 = vld [vmem:[#allocation10 + $0x14] sm:$0xf]
        %v790 = vld [vmem:[#allocation10 + $0x18] sm:$0xf]
        %v791 = vld [vmem:[#allocation10 + $0x1c] sm:$0xf]
        %v792 = vld [vmem:[#allocation10 + $0x20] sm:$0xf]
        %v793 = vld [vmem:[#allocation10 + $0x24] sm:$0xf]
        %v794 = vld [vmem:[#allocation10 + $0x28] sm:$0xf]
        %v795 = vld [vmem:[#allocation10 + $0x2c] sm:$0xf]
        %v796 = vld [vmem:[#allocation10 + $0x30] sm:$0xf]
        %v797 = vld [vmem:[#allocation10 + $0x34] sm:$0xf]
        %v798 = vld [vmem:[#allocation10 + $0x38] sm:$0xf]
        %v799 = vld [vmem:[#allocation10 + $0x3c] sm:$0xf]
        %v800 = vld [vmem:[%s8] sm:$0x1]
        %v802 = vlaneseq
        %v803 = vshrl.u32 %v802, 7
        %v804 = vsub.s32 0, %v803
        %v805 = vrot.slane %v800, %v804
        %v823 = vunpack.c.l.b16 %v784
        %v824 = vunpack.c.l.b16 %v785
        %v825 = vunpack.c.l.b16 %v786
        %v826 = vunpack.c.l.b16 %v787
        %v827 = vunpack.c.l.b16 %v788
        %v828 = vunpack.c.l.b16 %v789
        %v829 = vunpack.c.l.b16 %v790
        %v830 = vunpack.c.l.b16 %v791
        %v831 = vunpack.c.l.b16 %v792
        %v832 = vunpack.c.l.b16 %v793
        %v833 = vunpack.c.l.b16 %v794
        %v834 = vunpack.c.l.b16 %v795
        %v835 = vunpack.c.l.b16 %v796
        %v836 = vunpack.c.l.b16 %v797
        %v837 = vunpack.c.l.b16 %v798
        %v838 = vunpack.c.l.b16 %v799
        %v839 = vpack.c.b16 %v824, %v823
        %v840 = vpack.c.b16 %v826, %v825
        %v841 = vpack.c.b16 %v828, %v827
        %v842 = vpack.c.b16 %v830, %v829
        %v843 = vpack.c.b16 %v832, %v831
        %v844 = vpack.c.b16 %v834, %v833
        %v845 = vpack.c.b16 %v836, %v835
        %v846 = vpack.c.b16 %v838, %v837
        %855 = vmatprep.subr.bf16.mxu0 0
        %856 = vmatpush1.bf16.msra.mxu0 %v839
        %857 = vmatprep.subr.bf16.mxu0 0
        %858 = vmatpush1.bf16.msra.mxu0 %v840
        %859 = vmatprep.subr.bf16.mxu0 0
        %860 = vmatpush1.bf16.msra.mxu0 %v841
        %861 = vmatprep.subr.bf16.mxu0 0
        %862 = vmatpush1.bf16.msra.mxu0 %v842
        %863 = vmatprep.subr.bf16.mxu0 0
        %864 = vmatpush1.bf16.msra.mxu0 %v843
        %865 = vmatprep.subr.bf16.mxu0 0
        %866 = vmatpush1.bf16.msra.mxu0 %v844
        %867 = vmatprep.subr.bf16.mxu0 0
        %868 = vmatpush1.bf16.msra.mxu0 %v845
        %869 = vmatprep.subr.bf16.mxu0 0
        %870 = vmatpush1.bf16.msra.mxu0 %v846
        %871 = vmatprep.subr.bf16.mxu0 0
        %872 = vmatpush1.bf16.msra.mxu0 0
        %873 = vmatprep.subr.bf16.mxu0 0
        %874 = vmatpush1.bf16.msra.mxu0 0
        %875 = vmatprep.subr.bf16.mxu0 0
        %876 = vmatpush1.bf16.msra.mxu0 0
        %877 = vmatprep.subr.bf16.mxu0 0
        %878 = vmatpush1.bf16.msra.mxu0 0
        %879 = vmatprep.subr.bf16.mxu0 0
        %880 = vmatpush1.bf16.msra.mxu0 0
        %881 = vmatprep.subr.bf16.mxu0 0
        %882 = vmatpush1.bf16.msra.mxu0 0
        %883 = vmatprep.subr.bf16.mxu0 0
        %884 = vmatpush1.bf16.msra.mxu0 0
        %885 = vmatprep.subr.bf16.mxu0 0
        %886 = vmatpush1.bf16.msra.mxu0 0
        %887 = vmatprep.mubr.bf16.mxu0 0
        %888 = vmatmul.mubr.bf16.gmra.mrb[0].mxu0 %v783
        %v889 = vpop.f32.mrb[0].mxu0
        %v890 = vadd.f32 %v805, %v889
        %v891 = vpop.f32.mrb[0].mxu0
        %v892 = vpop.f32.mrb[0].mxu0
        %v893 = vadd.f32 %v805, %v892
        %v894 = vpop.f32.mrb[0].mxu0
        %895 = vdwg.mxu0
        %v896 = vsub.f32 0.0, %v890
        %v897 = vsub.f32 0.0, %v893
        %v898 = vmul.f32 %v896, 1.442695
        %v899 = vpow.pop %v898
        %v900 = vmul.f32 %v897, 1.442695
        %v901 = vpow.pop %v900
        %v902 = vadd.f32 %v899, 1.0
        %v903 = vadd.f32 %v901, 1.0
        %v904 = vrcp.pop %v902
        %v905 = vrcp.pop %v903
        %906 = vst [vmem:[%s408] sm:$0xff] %v904
        %907 = vst [vmem:[%s408 + $0x8] sm:$0xff] %v905
        %s908 = sand.u32 %s230, 1
        %s909 = scalar_lea.sflag [#allocation4], %s908
        %s910 = sand.u32 %s230, 1
        %s911 = smul.addr %s910, 16
        %s912 = scalar_lea.vmem [#allocation11], %s911
        // Predicated region
        $region77: #{tpu_custom_call.1} parent=55 // pred_check
          %p913 = pneg %p240
        $region78: #{tpu_custom_call.1} parent=55 // pred_check_branch
          %915 = sbr.rel (%p913) target = $region80
        $region79: #{tpu_custom_call.1} parent=55 // pred_region
          %s916 = smul.u32 2, %s28
          %s918 = ssub.s32 256, 256
          %919 = vsyncadd %s909, %s918
          %s920 = smul.addr %s916, 128
          %s921 = scalar_lea.hbm %s9, %s920
          %s922 = sshll.u32 %s912, 4
          %s923 = int_to_ptr.vmem [resolvable:$true] %s922
          %928 = dma.vmem_to_hbm [thread:$0]  %s923, 256, %s921, %s909, 128, 128, 8
        $region80: #{tpu_custom_call.1} parent=55 // pred_fallthru
          _
      $region56: #{tpu_custom_call.1} parent=5 // pred_fallthru
        _
      %p929 = scmp.le.s32.totalorder 2, %s23
      // Predicated region
      $region81: #{tpu_custom_call.1} parent=5 // pred_check
        %p930 = pneg %p929
      $region82: #{tpu_custom_call.1} parent=5 // pred_check_branch
        %932 = sbr.rel (%p930) target = $region84
      $region83: #{tpu_custom_call.1} parent=5 // pred_region
        %s933 = ssub.s32 %s23, 2
        // Predicated region
        $region85: #{tpu_custom_call.1} parent=83 // pred_check
          %p934 = pneg %p246
        $region86: #{tpu_custom_call.1} parent=83 // pred_check_branch
          %936 = sbr.rel (%p934) target = $region88
        $region87: #{tpu_custom_call.1} parent=83 // pred_region
          %s937 = sand.u32 %s231, 1
          %s938 = scalar_lea.sflag [#allocation4], %s937
          %s939 = sand.u32 %s231, 1
          %s940 = smul.addr %s939, 16
          %s941 = scalar_lea.vmem [#allocation11], %s940
          %942 = dma.done %s938, 256
        $region88: #{tpu_custom_call.1} parent=83 // pred_fallthru
          _
      $region84: #{tpu_custom_call.1} parent=5 // pred_fallthru
        _
    $region6: #{tpu_custom_call.1} parent=1 // loop_footer
      %s27 = sadd.s32 1, %s23
    $region7: #{tpu_custom_call.1} parent=1 // loop_footer_branch
      %22 = sbr.rel target = $region3
    $region8: #{tpu_custom_call.1} parent=1 // loop_exit
      _
    %943 = vsyncpa [#allocation3], 1
    %s944 = scalar_lea.sflag [#allocation3], 1
    %945 = vsyncpa %s944, 1
    %946 = vsyncpa [#allocation6], 1
    %947 = vsyncpa [#allocation9], 1
    %948 = vsyncpa [#allocation4], 1
    %s949 = scalar_lea.sflag [#allocation4], 1
    %950 = vsyncpa %s949, 1

</llo_original>
